<compile_context>
chip_gen: v7x
topology: tpu7x:2x2x1
jax: 0.10.0
libtpu: 0.0.40
codegen_flags: <defaults>
</compile_context>

<pallas_src>
import jax
import jax.numpy as jnp
from jax.experimental import pallas as pl
from jax.experimental.pallas import tpu as pltpu


def _round_up(x, m):
    return ((x + m - 1) // m) * m


def _expert_kernel(x_ref, w_ref, brow_ref, o_ref):
    # (tm, Kp) bf16 @ (Kp, tn) bf16 -> f32 accumulate on the MXU; the folded
    # bias row (f32) is then subtracted from the f32 accumulator on the VPU.
    acc = jnp.dot(x_ref[...], w_ref[...], preferred_element_type=jnp.float32)
    o_ref[...] = (acc - brow_ref[...]).astype(o_ref.dtype)


def prepare_expert_params(weight, bias):
    """One-time (init-time) parameter preparation — hoisted out of the forward.

    weight: (output_size, input_size) f32   (PyTorch nn.Linear layout)
    bias:   (input_size,)             f32

    Returns:
      w_t      (Kp, O) bf16 : transposed weight, K zero-padded to a 128 multiple
      bias_row (1, O)  f32  : bias @ W^T, folded so the kernel computes
                              y = x @ W^T - bias_row  (== (x - bias) @ W^T)
    """
    O, K = weight.shape
    w_t = jnp.transpose(weight).astype(jnp.float32)            # (K, O)
    bias_row = (bias.reshape(1, K) @ w_t).astype(jnp.float32)   # (1, O), f32
    Kp = _round_up(K, 128)
    if Kp != K:
        w_t = jnp.pad(w_t, ((0, Kp - K), (0, 0)))               # zero rows: exact
    return w_t.astype(jnp.bfloat16), bias_row


def expert_forward(embs, w_t, bias_row, *, tile_m=256, tile_n=512):
    """(embs - bias) @ weight.T using params from prepare_expert_params."""
    N, K = embs.shape
    Kp, O = w_t.shape

    # Activations: zero-pad K to the padded weight K (padded weight rows are
    # zero so the product is unchanged) and cast to bf16 for the MXU.
    x = embs
    if Kp != K:
        x = jnp.pad(x, ((0, 0), (0, Kp - K)))
    x = x.astype(jnp.bfloat16)

    # --- M tiling: multiple of 8 sublanes; ensure >= 2 blocks when possible so
    # the "parallel" M axis keeps both v7x TensorCores busy.
    tm = min(tile_m, _round_up(N, 8))
    if N > 8 and pl.cdiv(N, tm) < 2:
        tm = max(8, _round_up(pl.cdiv(N, 2), 8))
    gm = pl.cdiv(N, tm)

    # --- O tiling: lane-dense (multiple of 128) weight/output slabs.
    if O % 128 == 0:
        tn = min(_round_up(tile_n, 128), O)
    else:
        tn = O  # full-extent block along O
    gn = pl.cdiv(O, tn)

    # Explicit VMEM budget from actual block bytes (double-buffered operands).
    x_b = tm * Kp * 2          # bf16 x tile
    w_b = Kp * tn * 2          # bf16 weight slab
    b_b = 8 * tn * 4           # (1, tn) f32 pads to 8 sublanes
    o_b = tm * tn * 4          # f32 output tile
    vmem_limit = 2 * (x_b + w_b + b_b + o_b) + (2 << 20)
    vmem_limit = max(16 << 20, min(vmem_limit, 64 << 20))

    cost = pl.CostEstimate(
        flops=2 * N * Kp * O,
        transcendentals=0,
        bytes_accessed=N * Kp * 2 + Kp * O * 2 + O * 4 + N * O * 4,
    )

    return pl.pallas_call(
        _expert_kernel,
        out_shape=jax.ShapeDtypeStruct((N, O), jnp.float32),
        grid_spec=pltpu.PrefetchScalarGridSpec(
            num_scalar_prefetch=0,
            grid=(gm, gn),
            in_specs=[
                pl.BlockSpec((tm, Kp), lambda i, j: (i, 0)),   # x row tile
                pl.BlockSpec((Kp, tn), lambda i, j: (0, j)),   # weight O slab
                pl.BlockSpec((1, tn), lambda i, j: (0, j)),    # folded bias row
            ],
            out_specs=pl.BlockSpec((tm, tn), lambda i, j: (i, j)),
        ),
        compiler_params=pltpu.CompilerParams(
            dimension_semantics=("parallel", "parallel"),
            vmem_limit_bytes=vmem_limit,
        ),
        cost_estimate=cost,
    )(x, w_t, bias_row)


def _reference(embs, bias, weight):
    """Pure-JAX reference mirroring the PyTorch forward."""
    return (embs - bias) @ weight.T


def _run_case(key, N, K, O, tile_m, tile_n, label):
    k_x, k_w, k_b = jax.random.split(key, 3)
    embs = jax.random.normal(k_x, (N, K), jnp.float32)
    # nn.Linear weight init: normal(mean=0, std=0.02), layout (out, in).
    weight = 0.02 * jax.random.normal(k_w, (O, K), jnp.float32)
    # Module inits bias to zeros; use nonzero values so the bias path is tested.
    bias = 0.1 * jax.random.normal(k_b, (K,), jnp.float32)

    w_t, bias_row = prepare_expert_params(weight, bias)   # init-time, hoisted
    out = expert_forward(embs, w_t, bias_row, tile_m=tile_m, tile_n=tile_n)
    out = jax.block_until_ready(out)

    ref = _reference(embs, bias, weight)
    assert out.shape == (N, O)
    # bf16 matmul inputs with f32 accumulation: check relative Frobenius error.
    rel = float(jnp.linalg.norm(out - ref) / (jnp.linalg.norm(ref) + 1e-12))
    assert rel < 2e-2, f"{label}: relative error {rel} vs reference"
    return out


if __name__ == "__main__":
    key = jax.random.PRNGKey(0)
    k1, k2 = jax.random.split(key)
    # Small module-consistent shapes; K=64 exercises the 128-lane zero-pad path.
    _run_case(k1, N=8, K=64, O=128, tile_m=256, tile_n=512, label="small")
    # Slightly larger case so the (gm, gn) tiling path (>1 block per axis) runs.
    _run_case(k2, N=96, K=256, O=256, tile_m=32, tile_n=128, label="tiled")
    print("KERNEL_OK")
</pallas_src>

<mosaic_0001>
module attributes {stable_mosaic.version = 11 : i64} {
  func.func @_expert_kernel(%arg0: i32, %arg1: i32, %arg2: memref<8x128xbf16, #tpu.memory_space<vmem>>, %arg3: memref<128x128xbf16, #tpu.memory_space<vmem>>, %arg4: memref<1x128xf32, #tpu.memory_space<vmem>>, %arg5: memref<8x128xf32, #tpu.memory_space<vmem>>) attributes {dimension_semantics = [#tpu.dimension_semantics<parallel>, #tpu.dimension_semantics<parallel>], iteration_bounds = array<i64: 1, 1>, scalar_prefetch = 0 : i64, scratch_operands = 0 : i64, tpu.core_type = #tpu.core_type<tc>, window_params = [{transform_indices = @transform_0, window_bounds = array<i64: 8, 128>}, {transform_indices = @transform_1, window_bounds = array<i64: 128, 128>}, {transform_indices = @transform_2, window_bounds = array<i64: 1, 128>}, {transform_indices = @transform_3, window_bounds = array<i64: 8, 128>}]} {
    %c0 = arith.constant 0 : index
    %c0_0 = arith.constant 0 : index
    %0 = vector.load %arg2[%c0, %c0_0] : memref<8x128xbf16, #tpu.memory_space<vmem>>, vector<8x128xbf16>
    %c0_1 = arith.constant 0 : index
    %c0_2 = arith.constant 0 : index
    %1 = vector.load %arg3[%c0_1, %c0_2] : memref<128x128xbf16, #tpu.memory_space<vmem>>, vector<128x128xbf16>
    %cst = arith.constant dense<0.000000e+00> : vector<8x128xf32>
    %2 = tpu.matmul %0, %1, %cst {dimension_numbers = #tpu.dot_dimension_numbers<[1], [0], [0], [1], [0, 0, 1, 1], [], []>} : vector<8x128xbf16>, vector<128x128xbf16>, vector<8x128xf32> -> vector<8x128xf32>
    %c0_3 = arith.constant 0 : index
    %c0_4 = arith.constant 0 : index
    %3 = vector.load %arg4[%c0_3, %c0_4] : memref<1x128xf32, #tpu.memory_space<vmem>>, vector<1x128xf32>
    %4 = vector.broadcast %3 : vector<1x128xf32> to vector<8x128xf32>
    %5 = arith.subf %2, %4 : vector<8x128xf32>
    %c0_5 = arith.constant 0 : index
    %c0_6 = arith.constant 0 : index
    %6 = vector.load %arg5[%c0_5, %c0_6] : memref<8x128xf32, #tpu.memory_space<vmem>>, vector<8x128xf32>
    tpu.vector_store %arg5[%c0_5, %c0_6], %5 {strides = array<i32>} : memref<8x128xf32, #tpu.memory_space<vmem>>, vector<8x128xf32>,
    return
  }
  func.func @transform_0(%arg0: i32, %arg1: i32) -> (i32, i32) {
    %c0_i32 = arith.constant 0 : i32
    %c0_i32_0 = arith.constant 0 : i32
    return %arg0, %c0_i32 : i32, i32
  }
  func.func @transform_1(%arg0: i32, %arg1: i32) -> (i32, i32) {
    %c0_i32 = arith.constant 0 : i32
    %c0_i32_0 = arith.constant 0 : i32
    return %c0_i32, %arg1 : i32, i32
  }
  func.func @transform_2(%arg0: i32, %arg1: i32) -> (i32, i32) {
    %c0_i32 = arith.constant 0 : i32
    %c0_i32_0 = arith.constant 0 : i32
    return %c0_i32, %arg1 : i32, i32
  }
  func.func @transform_3(%arg0: i32, %arg1: i32) -> (i32, i32) {
    %c0_i32 = arith.constant 0 : i32
    return %arg0, %arg1 : i32, i32
  }
}

</mosaic_0001>

<llo_original>
// kernel: tpu_custom_call.1
$region0: #{tpu_custom_call.1}
  #allocation0 [shape = 'u32[]', space=smem, size = 0x4, offset = 0x4, fixed_abs, tag = 'smem constant byte address 0x4 - core index']
  #allocation1 [shape = 'u32[144,128]{1,0:T(1,128)}', space=vmem, size = 0x12000, scoped, tag = 'internal scratch']
  %s0 = inlined_call_operand.hbm [shape: bf16[8,128], index: 0, kind: input, shape index: {}]
  %s1 = inlined_call_operand.hbm [shape: bf16[128,128], index: 1, kind: input, shape index: {}]
  %s2 = inlined_call_operand.vmem [shape: f32[1,128], index: 2, kind: input, shape index: {}]
  %s3 = inlined_call_operand.hbm [shape: f32[8,128], index: 3, kind: output, shape index: {}]
  %s4 = sld [smem:[#allocation0]]
  $region30: #{tpu_custom_call.1} parent=0
    _
  %s6 = ssub.s32 1, %s4
  %s7 = scalar_select 0, %s6, %s4
  $region1: #{tpu_custom_call.1} parent=0
    #allocation2 [shape = 'u8[2048]{0}', space=vmem, size = 0x800, scoped, tag = 'input window, operand 0, single buffered']
    #allocation3 [shape = 's32[1]{0}', space=sflag, size = 0x4, scoped, tag = 'scoped memory for tpu_custom_call.1']
    #allocation4 [shape = 's32[1]{0}', space=sflag, size = 0x4, scoped, tag = 'scoped memory for tpu_custom_call.1']
    #allocation5 [shape = 'u8[32768]{0}', space=vmem, size = 0x8000, scoped, tag = 'input window, operand 1, single buffered']
    #allocation6 [shape = 's32[1]{0}', space=sflag, size = 0x4, scoped, tag = 'scoped memory for tpu_custom_call.1']
    #allocation7 [shape = 'u8[4096]{0}', space=vmem, size = 0x1000, scoped, tag = 'output window, operand 0, single buffered']
    %8 = vsyncpa [#allocation3], 0
    %9 = vsyncpa [#allocation6], 0
    %10 = vsyncpa [#allocation4], 0
    // Predicated region
    $region2: #{tpu_custom_call.1} parent=1 // pred_check
      _
    $region3: #{tpu_custom_call.1} parent=1 // pred_check_branch
      %12 = sbr.rel (0) target = $region5
    $region4: #{tpu_custom_call.1} parent=1 // pred_region
      %s14 = ssub.s32 64, 64
      %15 = vsyncadd [#allocation3], %s14
      %s17 = sshll.u32 [#allocation2], 4
      %s18 = int_to_ptr.vmem [resolvable:$true] %s17
      %20 = dma.hbm_to_vmem [thread:$0]  %s0, 64, %s18, [#allocation3]
    $region5: #{tpu_custom_call.1} parent=1 // pred_fallthru
      _
    // Predicated region
    $region6: #{tpu_custom_call.1} parent=1 // pred_check
      _
    $region7: #{tpu_custom_call.1} parent=1 // pred_check_branch
      %22 = sbr.rel (0) target = $region9
    $region8: #{tpu_custom_call.1} parent=1 // pred_region
      %s24 = ssub.s32 1024, 1024
      %25 = vsyncadd [#allocation6], %s24
      %s26 = sshll.u32 [#allocation5], 4
      %s27 = int_to_ptr.vmem [resolvable:$true] %s26
      %32 = dma.hbm_to_vmem [thread:$0]  %s1, 1024, %s27, [#allocation6], 64, 64, 4
    $region9: #{tpu_custom_call.1} parent=1 // pred_fallthru
      _
    // Predicated region
    $region10: #{tpu_custom_call.1} parent=1 // pred_check
      _
    $region11: #{tpu_custom_call.1} parent=1 // pred_check_branch
      %34 = sbr.rel (0) target = $region13
    $region12: #{tpu_custom_call.1} parent=1 // pred_region
      _
    $region13: #{tpu_custom_call.1} parent=1 // pred_fallthru
      _
    // Predicated region
    $region14: #{tpu_custom_call.1} parent=1 // pred_check
      _
    $region15: #{tpu_custom_call.1} parent=1 // pred_check_branch
      %36 = sbr.rel (0) target = $region17
    $region16: #{tpu_custom_call.1} parent=1 // pred_region
      %37 = dma.done [#allocation3], 64
    $region17: #{tpu_custom_call.1} parent=1 // pred_fallthru
      _
    // Predicated region
    $region18: #{tpu_custom_call.1} parent=1 // pred_check
      _
    $region19: #{tpu_custom_call.1} parent=1 // pred_check_branch
      %39 = sbr.rel (0) target = $region21
    $region20: #{tpu_custom_call.1} parent=1 // pred_region
      %40 = dma.done [#allocation6], 1024
    $region21: #{tpu_custom_call.1} parent=1 // pred_fallthru
      _
    %v42 = vld [vmem:[#allocation2] sm:$0xf]
    %v43 = vld [vmem:[#allocation5] sm:$0xf]
    %v44 = vld [vmem:[#allocation5 + $0x4] sm:$0xf]
    %v45 = vld [vmem:[#allocation5 + $0x8] sm:$0xf]
    %v46 = vld [vmem:[#allocation5 + $0xc] sm:$0xf]
    %v47 = vld [vmem:[#allocation5 + $0x10] sm:$0xf]
    %v48 = vld [vmem:[#allocation5 + $0x14] sm:$0xf]
    %v49 = vld [vmem:[#allocation5 + $0x18] sm:$0xf]
    %v50 = vld [vmem:[#allocation5 + $0x1c] sm:$0xf]
    %v51 = vld [vmem:[#allocation5 + $0x20] sm:$0xf]
    %v52 = vld [vmem:[#allocation5 + $0x24] sm:$0xf]
    %v53 = vld [vmem:[#allocation5 + $0x28] sm:$0xf]
    %v54 = vld [vmem:[#allocation5 + $0x2c] sm:$0xf]
    %v55 = vld [vmem:[#allocation5 + $0x30] sm:$0xf]
    %v56 = vld [vmem:[#allocation5 + $0x34] sm:$0xf]
    %v57 = vld [vmem:[#allocation5 + $0x38] sm:$0xf]
    %v58 = vld [vmem:[#allocation5 + $0x3c] sm:$0xf]
    %v75 = vunpack.c.l.b16 %v43
    %v76 = vunpack.c.l.b16 %v44
    %v77 = vunpack.c.l.b16 %v45
    %v78 = vunpack.c.l.b16 %v46
    %v79 = vunpack.c.l.b16 %v47
    %v80 = vunpack.c.l.b16 %v48
    %v81 = vunpack.c.l.b16 %v49
    %v82 = vunpack.c.l.b16 %v50
    %v83 = vunpack.c.l.b16 %v51
    %v84 = vunpack.c.l.b16 %v52
    %v85 = vunpack.c.l.b16 %v53
    %v86 = vunpack.c.l.b16 %v54
    %v87 = vunpack.c.l.b16 %v55
    %v88 = vunpack.c.l.b16 %v56
    %v89 = vunpack.c.l.b16 %v57
    %v90 = vunpack.c.l.b16 %v58
    %v91 = vpack.c.b16 %v76, %v75
    %v92 = vpack.c.b16 %v78, %v77
    %v93 = vpack.c.b16 %v80, %v79
    %v94 = vpack.c.b16 %v82, %v81
    %v95 = vpack.c.b16 %v84, %v83
    %v96 = vpack.c.b16 %v86, %v85
    %v97 = vpack.c.b16 %v88, %v87
    %v98 = vpack.c.b16 %v90, %v89
    %107 = vmatprep.subr.bf16.mxu0 0
    %108 = vmatpush1.bf16.msra.mxu0 %v91
    %109 = vmatprep.subr.bf16.mxu0 0
    %110 = vmatpush1.bf16.msra.mxu0 %v92
    %111 = vmatprep.subr.bf16.mxu0 0
    %112 = vmatpush1.bf16.msra.mxu0 %v93
    %113 = vmatprep.subr.bf16.mxu0 0
    %114 = vmatpush1.bf16.msra.mxu0 %v94
    %115 = vmatprep.subr.bf16.mxu0 0
    %116 = vmatpush1.bf16.msra.mxu0 %v95
    %117 = vmatprep.subr.bf16.mxu0 0
    %118 = vmatpush1.bf16.msra.mxu0 %v96
    %119 = vmatprep.subr.bf16.mxu0 0
    %120 = vmatpush1.bf16.msra.mxu0 %v97
    %121 = vmatprep.subr.bf16.mxu0 0
    %122 = vmatpush1.bf16.msra.mxu0 %v98
    %123 = vmatprep.subr.bf16.mxu0 0
    %124 = vmatpush1.bf16.msra.mxu0 0
    %125 = vmatprep.subr.bf16.mxu0 0
    %126 = vmatpush1.bf16.msra.mxu0 0
    %127 = vmatprep.subr.bf16.mxu0 0
    %128 = vmatpush1.bf16.msra.mxu0 0
    %129 = vmatprep.subr.bf16.mxu0 0
    %130 = vmatpush1.bf16.msra.mxu0 0
    %131 = vmatprep.subr.bf16.mxu0 0
    %132 = vmatpush1.bf16.msra.mxu0 0
    %133 = vmatprep.subr.bf16.mxu0 0
    %134 = vmatpush1.bf16.msra.mxu0 0
    %135 = vmatprep.subr.bf16.mxu0 0
    %136 = vmatpush1.bf16.msra.mxu0 0
    %137 = vmatprep.subr.bf16.mxu0 0
    %138 = vmatpush1.bf16.msra.mxu0 0
    %139 = vmatprep.mubr.bf16.mxu0 0
    %140 = vmatmul.mubr.bf16.gmra.mrb[0].mxu0 %v42
    %v141 = vpop.f32.mrb[0].mxu0
    %v142 = vadd.f32 0.0, %v141
    %v143 = vpop.f32.mrb[0].mxu0
    %v144 = vpop.f32.mrb[0].mxu0
    %v145 = vpop.f32.mrb[0].mxu0
    %146 = vdwg.mxu0
    %v147 = vld [vmem:[%s2] sm:$0x1]
    %v149 = vlaneseq
    %v150 = vshrl.u32 %v149, 7
    %v151 = vsub.s32 0, %v150
    %v152 = vrot.slane %v147, %v151
    %v154 = vsub.f32 %v142, %v152
    %155 = vst [vmem:[#allocation7] sm:$0xff] %v154
    // Predicated region
    $region22: #{tpu_custom_call.1} parent=1 // pred_check
      _
    $region23: #{tpu_custom_call.1} parent=1 // pred_check_branch
      %157 = sbr.rel (0) target = $region25
    $region24: #{tpu_custom_call.1} parent=1 // pred_region
      %s159 = ssub.s32 128, 128
      %160 = vsyncadd [#allocation4], %s159
      %s162 = sshll.u32 [#allocation7], 4
      %s163 = int_to_ptr.vmem [resolvable:$true] %s162
      %165 = dma.vmem_to_hbm [thread:$0]  %s163, 128, %s3, [#allocation4]
    $region25: #{tpu_custom_call.1} parent=1 // pred_fallthru
      _
    // Predicated region
    $region26: #{tpu_custom_call.1} parent=1 // pred_check
      _
    $region27: #{tpu_custom_call.1} parent=1 // pred_check_branch
      %167 = sbr.rel (0) target = $region29
    $region28: #{tpu_custom_call.1} parent=1 // pred_region
      %168 = dma.done [#allocation4], 128
    $region29: #{tpu_custom_call.1} parent=1 // pred_fallthru
      _
    %169 = vsyncpa [#allocation3], 1
    %170 = vsyncpa [#allocation6], 1
    %171 = vsyncpa [#allocation4], 1

</llo_original>
